<compile_context>
chip_gen: v6e
topology: v6e:2x2x1
jax: 0.10.0
libtpu: 0.0.40
codegen_flags: <defaults>
</compile_context>

<pallas_src>
import functools

import jax
import jax.numpy as jnp
from jax import lax
from jax.experimental import pallas as pl
from jax.experimental.pallas import tpu as pltpu


# --------------------------------------------------------------------------------------
# Fused kernel: dense SAGEConv (mean aggregation) + L2 normalize + sigmoid
#               + 50-step label propagation, all in transposed (T, M) layout.
# --------------------------------------------------------------------------------------
def _gcn_fused_kernel(xt_ref, at_ref, w_ref, b_ref, pt_ref, lab_ref, o_ref, *,
                      t_pad, n_outer, unroll):
    # xt_ref:  (F_pad,  M_pad)  bf16   X^T (node features, transposed)
    # at_ref:  (M_pad,  M_pad)  bf16   A_mean^T (mean-aggregation operator, transposed)
    # w_ref:   (2*T_pad, F_pad) bf16   stacked [Wl ; Wr]
    # b_ref:   (T_pad,  1)      f32    lin_l bias (column)
    # pt_ref:  (M_pad,  M_pad)  bf16   (alpha * P)^T   (alpha folded in at prep time)
    # lab_ref: (T_pad,  M_pad)  f32    (1 - alpha) * label^T
    # o_ref:   (T_pad,  M_pad)  f32    propagated state x1^T

    # ---- dense SAGEConv: both projections in one K=F_pad dot ----
    wx = jnp.dot(w_ref[...], xt_ref[...], preferred_element_type=jnp.float32)
    wlx = wx[:t_pad, :]                  # (Wl X^T) = (X Wl^T)^T   neighbor projection
    wrx = wx[t_pad:, :]                  # (Wr X^T) = (X Wr^T)^T   root projection
    # Reassociated: (Wl X^T) A^T = (A_mean X Wl^T)^T, big dot has only T_pad result rows.
    h = jnp.dot(wlx.astype(jnp.bfloat16), at_ref[...],
                preferred_element_type=jnp.float32)
    h = h + wrx + b_ref[...]             # bias broadcast over the node (lane) axis
    # L2-normalize each node's feature vector (= sublane axis of h^T); matches
    # F.normalize(h, p=2, dim=-1, eps=1e-12). Zero-padded feature rows contribute nothing.
    ss = jnp.sum(h * h, axis=0, keepdims=True)
    h = h * lax.rsqrt(jnp.maximum(ss, 1e-24))
    # sigmoid = 1 / (1 + exp(-h)): exp on EUP, divide via approx reciprocal (EUP slot).
    o_ref[...] = pl.reciprocal(1.0 + jnp.exp(-h), approx=True)

    # ---- 50-step label propagation; the (T_pad, M_pad) state never leaves VMEM ----
    lab = lab_ref[...]                   # already scaled by (1 - alpha); hoisted out of loop

    def step(_, carry):
        x = o_ref[...]
        for _ in range(unroll):          # manual partial unroll of the serial chain
            x = jnp.dot(x.astype(jnp.bfloat16), pt_ref[...],
                        preferred_element_type=jnp.float32) + lab
        o_ref[...] = x
        return carry

    lax.fori_loop(0, n_outer, step, 0)


def _vmem_limit(*arrays, headroom=8 << 20, cap=48 << 20):
    # Right-size: double-buffered operands + Mosaic internal scratch headroom,
    # capped well under v7x's 64 MiB per-TC physical VMEM.
    data = sum(int(a.size) * a.dtype.itemsize for a in arrays)
    return int(min(2 * data + headroom, cap))


def gcn_fused(xt, at, w_stack, b_col, pt_scaled, labt_scaled, *, n_iters, unroll=5):
    t2, f_pad = w_stack.shape
    t_pad = t2 // 2
    m_pad = xt.shape[1]
    assert n_iters % unroll == 0, "unroll factor must divide n_iters"
    vmem = _vmem_limit(xt, at, w_stack, b_col, pt_scaled, labt_scaled)
    kernel = functools.partial(_gcn_fused_kernel, t_pad=t_pad,
                               n_outer=n_iters // unroll, unroll=unroll)
    return pl.pallas_call(
        kernel,
        out_shape=jax.ShapeDtypeStruct((t_pad, m_pad), jnp.float32),
        grid_spec=pltpu.PrefetchScalarGridSpec(
            num_scalar_prefetch=0,
            grid=(1,),
            in_specs=[
                pl.BlockSpec((f_pad, m_pad), lambda i: (0, 0)),       # X^T
                pl.BlockSpec((m_pad, m_pad), lambda i: (0, 0)),       # A_mean^T
                pl.BlockSpec((2 * t_pad, f_pad), lambda i: (0, 0)),   # [Wl ; Wr]
                pl.BlockSpec((t_pad, 1), lambda i: (0, 0)),           # bias
                pl.BlockSpec((m_pad, m_pad), lambda i: (0, 0)),       # (alpha * P)^T
                pl.BlockSpec((t_pad, m_pad), lambda i: (0, 0)),       # (1-alpha) * label^T
            ],
            out_specs=pl.BlockSpec((t_pad, m_pad), lambda i: (0, 0)),
        ),
        compiler_params=pltpu.CompilerParams(
            dimension_semantics=("arbitrary",),
            vmem_limit_bytes=vmem,
        ),
    )(xt, at, w_stack, b_col, pt_scaled, labt_scaled)


# --------------------------------------------------------------------------------------
# Wrapper-side (one-time) preprocessing and end-to-end forward
# --------------------------------------------------------------------------------------
def _round_up(x, m):
    return ((x + m - 1) // m) * m


def build_mean_aggregation(edge_index, num_nodes):
    """Dense mean-aggregation operator of SAGEConv: A[i, j] = 1/deg_in(i) for edge j->i."""
    src, dst = edge_index[0], edge_index[1]
    a = jnp.zeros((num_nodes, num_nodes), jnp.float32).at[dst, src].add(1.0)
    deg = jnp.sum(a, axis=1, keepdims=True)
    return a / jnp.maximum(deg, 1.0)


def prepare_gcn_inputs(x, a_mean, p, label, wl, wr, bias, *, alpha):
    """One-time prep (outside the hot path): transpose everything to the (T, M) layout,
    pad to MXU/lane-friendly shapes, fold alpha into P and (1-alpha) into label, and cast
    the matmul operands to bf16."""
    m, f_in = x.shape
    t = wl.shape[0]
    m_pad = _round_up(m, 128)        # lane dim everywhere
    f_pad = _round_up(f_in, 128)
    t_pad = _round_up(t, 8)          # f32 sublane dim of the propagated state

    def pad2(arr, rows, cols):
        return jnp.pad(arr, ((0, rows - arr.shape[0]), (0, cols - arr.shape[1])))

    xt = pad2(x.T, f_pad, m_pad).astype(jnp.bfloat16)                    # (F_pad, M_pad)
    at = pad2(a_mean.T, m_pad, m_pad).astype(jnp.bfloat16)               # (M_pad, M_pad)
    wl_p = pad2(wl, t_pad, f_pad)
    wr_p = pad2(wr, t_pad, f_pad)
    w_stack = jnp.concatenate([wl_p, wr_p], axis=0).astype(jnp.bfloat16)  # (2*T_pad, F_pad)
    b_col = jnp.pad(bias, (0, t_pad - t)).reshape(t_pad, 1).astype(jnp.float32)
    pt_scaled = pad2((alpha * p).T, m_pad, m_pad).astype(jnp.bfloat16)   # alpha folded in
    labt_scaled = pad2(((1.0 - alpha) * label).T, t_pad, m_pad).astype(jnp.float32)
    return xt, at, w_stack, b_col, pt_scaled, labt_scaled


def gcn_forward(xt, at, w_stack, b_col, pt_scaled, labt_scaled, *,
                n_iters, true_nodes, types, unroll=5):
    out_t = gcn_fused(xt, at, w_stack, b_col, pt_scaled, labt_scaled,
                      n_iters=n_iters, unroll=unroll)
    # (T_pad, M_pad) -> (true_nodes, types); the transpose of the tiny result is wrapper-side.
    return out_t.T[:true_nodes, :types]


if __name__ == "__main__":
    TYPES = 8                 # label types = SAGEConv out_channels
    N_LABEL = 248             # rows of data.logicalLabel
    M = N_LABEL + TYPES       # total nodes (label = cat([logicalLabel, ones(T,T)]))
    TRUE_NODES = 240
    F_IN = 32
    N_EDGES = 1024
    ALPHA = 0.9
    N_ITERS = 50
    UNROLL = 5

    key = jax.random.PRNGKey(0)
    kx, ke1, ke2, kwl, kwr, kb, kp, kl = jax.random.split(key, 8)

    x = jax.random.normal(kx, (M, F_IN), jnp.float32)
    src = jax.random.randint(ke1, (N_EDGES,), 0, M)
    dst = jax.random.randint(ke2, (N_EDGES,), 0, M)
    edge_index = jnp.stack([src, dst])

    bound = 1.0 / jnp.sqrt(jnp.float32(F_IN))
    wl = jax.random.uniform(kwl, (TYPES, F_IN), jnp.float32, -bound, bound)   # lin_l (neighbors)
    wr = jax.random.uniform(kwr, (TYPES, F_IN), jnp.float32, -bound, bound)   # lin_r (root)
    bias = jax.random.uniform(kb, (TYPES,), jnp.float32, -bound, bound)

    # data.P: row-stochastic propagation matrix
    p_raw = jax.random.uniform(kp, (M, M), jnp.float32, 0.0, 1.0)
    P = p_raw / jnp.sum(p_raw, axis=1, keepdims=True)

    # label = cat([logicalLabel, ones(types, types)], dim=0)
    logical_label = (jax.random.uniform(kl, (N_LABEL, TYPES)) < 0.2).astype(jnp.float32)
    label = jnp.concatenate([logical_label, jnp.ones((TYPES, TYPES), jnp.float32)], axis=0)

    a_mean = build_mean_aggregation(edge_index, M)

    # One-time preprocessing (transpose / pad / alpha folding / bf16 casts) — outside hot path.
    xt, at, w_stack, b_col, pt_scaled, labt_scaled = prepare_gcn_inputs(
        x, a_mean, P, label, wl, wr, bias, alpha=ALPHA)

    out = gcn_forward(xt, at, w_stack, b_col, pt_scaled, labt_scaled,
                      n_iters=N_ITERS, true_nodes=TRUE_NODES, types=TYPES, unroll=UNROLL)
    out = jax.block_until_ready(out)

    # -------- pure-JAX f32 reference --------
    hp = jax.lax.Precision.HIGHEST
    agg = jnp.dot(a_mean, x, precision=hp)
    h = jnp.dot(agg, wl.T, precision=hp) + jnp.dot(x, wr.T, precision=hp) + bias
    h = h / jnp.maximum(jnp.linalg.norm(h, axis=-1, keepdims=True), 1e-12)
    ref = jax.nn.sigmoid(h)
    for _ in range(N_ITERS):
        ref = ALPHA * jnp.dot(P, ref, precision=hp) + (1.0 - ALPHA) * label
    ref = ref[:TRUE_NODES]

    assert out.shape == (TRUE_NODES, TYPES)
    # bf16 operands in the conv and in the 50-step propagation (f32 accumulation throughout);
    # the alpha=0.9 contraction damps per-step rounding, and the conv's approx-sigmoid error is
    # washed out by alpha^50 — a modest absolute tolerance is ample.
    assert jnp.allclose(out, ref, atol=3e-2, rtol=1e-2), float(jnp.max(jnp.abs(out - ref)))

    print("KERNEL_OK")
</pallas_src>

<mosaic_0001>
module attributes {stable_mosaic.version = 11 : i64} {
  func.func @_gcn_fused_kernel(%arg0: i32, %arg1: memref<128x256xbf16, #tpu.memory_space<vmem>>, %arg2: memref<256x256xbf16, #tpu.memory_space<vmem>>, %arg3: memref<16x128xbf16, #tpu.memory_space<vmem>>, %arg4: memref<8x1xf32, #tpu.memory_space<vmem>>, %arg5: memref<256x256xbf16, #tpu.memory_space<vmem>>, %arg6: memref<8x256xf32, #tpu.memory_space<vmem>>, %arg7: memref<8x256xf32, #tpu.memory_space<vmem>>) attributes {dimension_semantics = [#tpu.dimension_semantics<arbitrary>], iteration_bounds = array<i64: 1>, scalar_prefetch = 0 : i64, scratch_operands = 0 : i64, tpu.core_type = #tpu.core_type<tc>, window_params = [{pipeline_mode = #tpu.pipeline_mode<synchronous>, transform_indices = @transform_0, window_bounds = array<i64: 128, 256>}, {pipeline_mode = #tpu.pipeline_mode<synchronous>, transform_indices = @transform_1, window_bounds = array<i64: 256, 256>}, {pipeline_mode = #tpu.pipeline_mode<synchronous>, transform_indices = @transform_2, window_bounds = array<i64: 16, 128>}, {pipeline_mode = #tpu.pipeline_mode<synchronous>, transform_indices = @transform_3, window_bounds = array<i64: 8, 1>}, {pipeline_mode = #tpu.pipeline_mode<synchronous>, transform_indices = @transform_4, window_bounds = array<i64: 256, 256>}, {pipeline_mode = #tpu.pipeline_mode<synchronous>, transform_indices = @transform_5, window_bounds = array<i64: 8, 256>}, {pipeline_mode = #tpu.pipeline_mode<synchronous>, transform_indices = @transform_6, window_bounds = array<i64: 8, 256>}]} {
    %c0 = arith.constant 0 : index
    %c0_0 = arith.constant 0 : index
    %0 = vector.load %arg3[%c0, %c0_0] : memref<16x128xbf16, #tpu.memory_space<vmem>>, vector<16x128xbf16>
    %c0_1 = arith.constant 0 : index
    %c0_2 = arith.constant 0 : index
    %1 = vector.load %arg1[%c0_1, %c0_2] : memref<128x256xbf16, #tpu.memory_space<vmem>>, vector<128x256xbf16>
    %cst = arith.constant dense<0.000000e+00> : vector<16x256xf32>
    %2 = tpu.matmul %0, %1, %cst {dimension_numbers = #tpu.dot_dimension_numbers<[1], [0], [0], [1], [0, 0, 1, 1], [], []>} : vector<16x128xbf16>, vector<128x256xbf16>, vector<16x256xf32> -> vector<16x256xf32>
    %3 = vector.extract_strided_slice %2 {offsets = [0, 0], sizes = [8, 256], strides = [1, 1]} : vector<16x256xf32> to vector<8x256xf32>
    %4 = vector.extract_strided_slice %2 {offsets = [8, 0], sizes = [8, 256], strides = [1, 1]} : vector<16x256xf32> to vector<8x256xf32>
    %5 = arith.truncf %3 : vector<8x256xf32> to vector<8x256xbf16>
    %c0_3 = arith.constant 0 : index
    %c0_4 = arith.constant 0 : index
    %6 = vector.load %arg2[%c0_3, %c0_4] : memref<256x256xbf16, #tpu.memory_space<vmem>>, vector<256x256xbf16>
    %cst_5 = arith.constant dense<0.000000e+00> : vector<8x256xf32>
    %7 = tpu.matmul %5, %6, %cst_5 {dimension_numbers = #tpu.dot_dimension_numbers<[1], [0], [0], [1], [0, 0, 1, 1], [], []>} : vector<8x256xbf16>, vector<256x256xbf16>, vector<8x256xf32> -> vector<8x256xf32>
    %8 = arith.addf %7, %4 : vector<8x256xf32>
    %c0_6 = arith.constant 0 : index
    %c0_7 = arith.constant 0 : index
    %9 = vector.load %arg4[%c0_6, %c0_7] : memref<8x1xf32, #tpu.memory_space<vmem>>, vector<8x1xf32>
    %10 = vector.broadcast %9 : vector<8x1xf32> to vector<8x256xf32>
    %11 = arith.addf %8, %10 : vector<8x256xf32>
    %12 = arith.mulf %11, %11 : vector<8x256xf32>
    %cst_8 = arith.constant dense<0.000000e+00> : vector<256xf32>
    %13 = vector.multi_reduction <add>, %12, %cst_8 [0] : vector<8x256xf32> to vector<256xf32>
    %14 = vector.shape_cast %13 : vector<256xf32> to vector<1x256xf32>
    %cst_9 = arith.constant 1.000000e-24 : f32
    %15 = vector.broadcast %cst_9 : f32 to vector<1x256xf32>
    %16 = arith.maximumf %14, %15 : vector<1x256xf32>
    %17 = math.rsqrt %16 : vector<1x256xf32>
    %18 = vector.broadcast %17 : vector<1x256xf32> to vector<8x256xf32>
    %19 = arith.mulf %11, %18 : vector<8x256xf32>
    %cst_10 = arith.constant 0.000000e+00 : f32
    %20 = vector.broadcast %cst_10 : f32 to vector<8x256xf32>
    %21 = arith.subf %20, %19 : vector<8x256xf32>
    %22 = math.exp %21 : vector<8x256xf32>
    %cst_11 = arith.constant 1.000000e+00 : f32
    %23 = vector.broadcast %cst_11 : f32 to vector<8x256xf32>
    %24 = arith.addf %23, %22 : vector<8x256xf32>
    %25 = tpu.reciprocal %24 {approx = true} : vector<8x256xf32> -> vector<8x256xf32>
    %c0_12 = arith.constant 0 : index
    %c0_13 = arith.constant 0 : index
    %26 = vector.load %arg7[%c0_12, %c0_13] : memref<8x256xf32, #tpu.memory_space<vmem>>, vector<8x256xf32>
    tpu.vector_store %arg7[%c0_12, %c0_13], %25 {strides = array<i32>} : memref<8x256xf32, #tpu.memory_space<vmem>>, vector<8x256xf32>,
    %c0_14 = arith.constant 0 : index
    %c0_15 = arith.constant 0 : index
    %27 = vector.load %arg6[%c0_14, %c0_15] : memref<8x256xf32, #tpu.memory_space<vmem>>, vector<8x256xf32>
    %c0_i32 = arith.constant 0 : i32
    %c10_i32 = arith.constant 10 : i32
    %28 = arith.addi %c0_i32, %c10_i32 : i32
    %c1_i32 = arith.constant 1 : i32
    scf.for %arg8 = %c0_i32 to %28 step %c1_i32  : i32 {
      %c0_16 = arith.constant 0 : index
      %c0_17 = arith.constant 0 : index
      %29 = vector.load %arg7[%c0_16, %c0_17] : memref<8x256xf32, #tpu.memory_space<vmem>>, vector<8x256xf32>
      %30 = arith.truncf %29 : vector<8x256xf32> to vector<8x256xbf16>
      %c0_18 = arith.constant 0 : index
      %c0_19 = arith.constant 0 : index
      %31 = vector.load %arg5[%c0_18, %c0_19] : memref<256x256xbf16, #tpu.memory_space<vmem>>, vector<256x256xbf16>
      %cst_20 = arith.constant dense<0.000000e+00> : vector<8x256xf32>
      %32 = tpu.matmul %30, %31, %cst_20 {dimension_numbers = #tpu.dot_dimension_numbers<[1], [0], [0], [1], [0, 0, 1, 1], [], []>} : vector<8x256xbf16>, vector<256x256xbf16>, vector<8x256xf32> -> vector<8x256xf32>
      %33 = arith.addf %32, %27 : vector<8x256xf32>
      %34 = arith.truncf %33 : vector<8x256xf32> to vector<8x256xbf16>
      %c0_21 = arith.constant 0 : index
      %c0_22 = arith.constant 0 : index
      %35 = vector.load %arg5[%c0_21, %c0_22] : memref<256x256xbf16, #tpu.memory_space<vmem>>, vector<256x256xbf16>
      %cst_23 = arith.constant dense<0.000000e+00> : vector<8x256xf32>
      %36 = tpu.matmul %34, %35, %cst_23 {dimension_numbers = #tpu.dot_dimension_numbers<[1], [0], [0], [1], [0, 0, 1, 1], [], []>} : vector<8x256xbf16>, vector<256x256xbf16>, vector<8x256xf32> -> vector<8x256xf32>
      %37 = arith.addf %36, %27 : vector<8x256xf32>
      %38 = arith.truncf %37 : vector<8x256xf32> to vector<8x256xbf16>
      %c0_24 = arith.constant 0 : index
      %c0_25 = arith.constant 0 : index
      %39 = vector.load %arg5[%c0_24, %c0_25] : memref<256x256xbf16, #tpu.memory_space<vmem>>, vector<256x256xbf16>
      %cst_26 = arith.constant dense<0.000000e+00> : vector<8x256xf32>
      %40 = tpu.matmul %38, %39, %cst_26 {dimension_numbers = #tpu.dot_dimension_numbers<[1], [0], [0], [1], [0, 0, 1, 1], [], []>} : vector<8x256xbf16>, vector<256x256xbf16>, vector<8x256xf32> -> vector<8x256xf32>
      %41 = arith.addf %40, %27 : vector<8x256xf32>
      %42 = arith.truncf %41 : vector<8x256xf32> to vector<8x256xbf16>
      %c0_27 = arith.constant 0 : index
      %c0_28 = arith.constant 0 : index
      %43 = vector.load %arg5[%c0_27, %c0_28] : memref<256x256xbf16, #tpu.memory_space<vmem>>, vector<256x256xbf16>
      %cst_29 = arith.constant dense<0.000000e+00> : vector<8x256xf32>
      %44 = tpu.matmul %42, %43, %cst_29 {dimension_numbers = #tpu.dot_dimension_numbers<[1], [0], [0], [1], [0, 0, 1, 1], [], []>} : vector<8x256xbf16>, vector<256x256xbf16>, vector<8x256xf32> -> vector<8x256xf32>
      %45 = arith.addf %44, %27 : vector<8x256xf32>
      %46 = arith.truncf %45 : vector<8x256xf32> to vector<8x256xbf16>
      %c0_30 = arith.constant 0 : index
      %c0_31 = arith.constant 0 : index
      %47 = vector.load %arg5[%c0_30, %c0_31] : memref<256x256xbf16, #tpu.memory_space<vmem>>, vector<256x256xbf16>
      %cst_32 = arith.constant dense<0.000000e+00> : vector<8x256xf32>
      %48 = tpu.matmul %46, %47, %cst_32 {dimension_numbers = #tpu.dot_dimension_numbers<[1], [0], [0], [1], [0, 0, 1, 1], [], []>} : vector<8x256xbf16>, vector<256x256xbf16>, vector<8x256xf32> -> vector<8x256xf32>
      %49 = arith.addf %48, %27 : vector<8x256xf32>
      %c0_33 = arith.constant 0 : index
      %c0_34 = arith.constant 0 : index
      %50 = vector.load %arg7[%c0_33, %c0_34] : memref<8x256xf32, #tpu.memory_space<vmem>>, vector<8x256xf32>
      tpu.vector_store %arg7[%c0_33, %c0_34], %49 {strides = array<i32>} : memref<8x256xf32, #tpu.memory_space<vmem>>, vector<8x256xf32>,
    }
    return
  }
  func.func @transform_0(%arg0: i32) -> (i32, i32) {
    %c0_i32 = arith.constant 0 : i32
    %c0_i32_0 = arith.constant 0 : i32
    %c0_i32_1 = arith.constant 0 : i32
    return %c0_i32, %c0_i32_0 : i32, i32
  }
  func.func @transform_1(%arg0: i32) -> (i32, i32) {
    %c0_i32 = arith.constant 0 : i32
    %c0_i32_0 = arith.constant 0 : i32
    %c0_i32_1 = arith.constant 0 : i32
    return %c0_i32, %c0_i32_0 : i32, i32
  }
  func.func @transform_2(%arg0: i32) -> (i32, i32) {
    %c0_i32 = arith.constant 0 : i32
    %c0_i32_0 = arith.constant 0 : i32
    %c0_i32_1 = arith.constant 0 : i32
    return %c0_i32, %c0_i32_0 : i32, i32
  }
  func.func @transform_3(%arg0: i32) -> (i32, i32) {
    %c0_i32 = arith.constant 0 : i32
    %c0_i32_0 = arith.constant 0 : i32
    %c0_i32_1 = arith.constant 0 : i32
    return %c0_i32, %c0_i32_0 : i32, i32
  }
  func.func @transform_4(%arg0: i32) -> (i32, i32) {
    %c0_i32 = arith.constant 0 : i32
    %c0_i32_0 = arith.constant 0 : i32
    %c0_i32_1 = arith.constant 0 : i32
    return %c0_i32, %c0_i32_0 : i32, i32
  }
  func.func @transform_5(%arg0: i32) -> (i32, i32) {
    %c0_i32 = arith.constant 0 : i32
    %c0_i32_0 = arith.constant 0 : i32
    %c0_i32_1 = arith.constant 0 : i32
    return %c0_i32, %c0_i32_0 : i32, i32
  }
  func.func @transform_6(%arg0: i32) -> (i32, i32) {
    %c0_i32 = arith.constant 0 : i32
    %c0_i32_0 = arith.constant 0 : i32
    %c0_i32_1 = arith.constant 0 : i32
    return %c0_i32, %c0_i32_0 : i32, i32
  }
}

</mosaic_0001>

<llo_original>
// kernel: tpu_custom_call.1
$region0: #{tpu_custom_call.1}
  #allocation0 [shape = 'u32[]', space=smem, size = 0x4, offset = 0x4, fixed_abs, tag = 'smem constant byte address 0x4 - core index']
  #allocation1 [shape = 'u32[144,128]{1,0:T(1,128)}', space=vmem, size = 0x12000, scoped, tag = 'internal scratch']
  %s0 = inlined_call_operand.hbm [shape: bf16[128,256], index: 0, kind: input, shape index: {}]
  %s1 = inlined_call_operand.hbm [shape: bf16[256,256], index: 1, kind: input, shape index: {}]
  %s2 = inlined_call_operand.hbm [shape: bf16[16,128], index: 2, kind: input, shape index: {}]
  %s3 = inlined_call_operand.vmem [shape: f32[8,1], index: 3, kind: input, shape index: {}]
  %s4 = inlined_call_operand.hbm [shape: bf16[256,256], index: 4, kind: input, shape index: {}]
  %s5 = inlined_call_operand.vmem [shape: f32[8,256], index: 5, kind: input, shape index: {}]
  %s6 = inlined_call_operand.hbm [shape: f32[8,256], index: 6, kind: output, shape index: {}]
  %s7 = sld [smem:[#allocation0]]
  $region57: #{tpu_custom_call.1} parent=0
    _
  %s9 = ssub.s32 1, %s7
  %s10 = scalar_select 0, %s9, %s7
  $region1: #{tpu_custom_call.1} parent=0
    #allocation2 [shape = 'u8[65536]{0}', space=vmem, size = 0x10000, scoped, tag = 'input window, operand 0, single buffered']
    #allocation3 [shape = 's32[1]{0}', space=sflag, size = 0x4, scoped, tag = 'scoped memory for tpu_custom_call.1']
    #allocation4 [shape = 's32[1]{0}', space=sflag, size = 0x4, scoped, tag = 'scoped memory for tpu_custom_call.1']
    #allocation5 [shape = 'u8[131072]{0}', space=vmem, size = 0x20000, scoped, tag = 'input window, operand 1, single buffered']
    #allocation6 [shape = 's32[1]{0}', space=sflag, size = 0x4, scoped, tag = 'scoped memory for tpu_custom_call.1']
    #allocation7 [shape = 'u8[4096]{0}', space=vmem, size = 0x1000, scoped, tag = 'input window, operand 2, single buffered']
    #allocation8 [shape = 'u8[131072]{0}', space=vmem, size = 0x20000, scoped, tag = 'input window, operand 4, single buffered']
    #allocation9 [shape = 's32[1]{0}', space=sflag, size = 0x4, scoped, tag = 'scoped memory for tpu_custom_call.1']
    #allocation10 [shape = 'u8[8192]{0}', space=vmem, size = 0x2000, scoped, tag = 'output window, operand 0, single buffered']
    %11 = vsyncpa [#allocation3], 0
    %12 = vsyncpa [#allocation6], 0
    %13 = vsyncpa [#allocation9], 0
    %14 = vsyncpa [#allocation4], 0
    // Predicated region
    $region2: #{tpu_custom_call.1} parent=1 // pred_check
      _
    $region3: #{tpu_custom_call.1} parent=1 // pred_check_branch
      %16 = sbr.rel (0) target = $region5
    $region4: #{tpu_custom_call.1} parent=1 // pred_region
      %s18 = ssub.s32 2048, 2048
      %19 = vsyncadd [#allocation3], %s18
      %s20 = sshll.u32 [#allocation2], 4
      %s21 = int_to_ptr.vmem [resolvable:$true] %s20
      %26 = dma.hbm_to_vmem [thread:$0]  %s0, 2048, %s21, [#allocation3], 128, 128, 8
    $region5: #{tpu_custom_call.1} parent=1 // pred_fallthru
      _
    // Predicated region
    $region6: #{tpu_custom_call.1} parent=1 // pred_check
      _
    $region7: #{tpu_custom_call.1} parent=1 // pred_check_branch
      %28 = sbr.rel (0) target = $region9
    $region8: #{tpu_custom_call.1} parent=1 // pred_region
      %s30 = ssub.s32 4096, 4096
      %31 = vsyncadd [#allocation6], %s30
      %s32 = sshll.u32 [#allocation5], 4
      %s33 = int_to_ptr.vmem [resolvable:$true] %s32
      %38 = dma.hbm_to_vmem [thread:$0]  %s1, 4096, %s33, [#allocation6], 128, 128, 8
    $region9: #{tpu_custom_call.1} parent=1 // pred_fallthru
      _
    // Predicated region
    $region10: #{tpu_custom_call.1} parent=1 // pred_check
      _
    $region11: #{tpu_custom_call.1} parent=1 // pred_check_branch
      %40 = sbr.rel (0) target = $region13
    $region12: #{tpu_custom_call.1} parent=1 // pred_region
      %s42 = ssub.s32 128, 128
      %43 = vsyncadd [#allocation6], %s42
      %s44 = sshll.u32 [#allocation7], 4
      %s45 = int_to_ptr.vmem [resolvable:$true] %s44
      %50 = dma.hbm_to_vmem [thread:$0]  %s2, 128, %s45, [#allocation6], 64, 64, 4
    $region13: #{tpu_custom_call.1} parent=1 // pred_fallthru
      _
    // Predicated region
    $region14: #{tpu_custom_call.1} parent=1 // pred_check
      _
    $region15: #{tpu_custom_call.1} parent=1 // pred_check_branch
      %52 = sbr.rel (0) target = $region17
    $region16: #{tpu_custom_call.1} parent=1 // pred_region
      _
    $region17: #{tpu_custom_call.1} parent=1 // pred_fallthru
      _
    // Predicated region
    $region18: #{tpu_custom_call.1} parent=1 // pred_check
      _
    $region19: #{tpu_custom_call.1} parent=1 // pred_check_branch
      %54 = sbr.rel (0) target = $region21
    $region20: #{tpu_custom_call.1} parent=1 // pred_region
      %s56 = ssub.s32 4096, 4096
      %57 = vsyncadd [#allocation9], %s56
      %s58 = sshll.u32 [#allocation8], 4
      %s59 = int_to_ptr.vmem [resolvable:$true] %s58
      %64 = dma.hbm_to_vmem [thread:$0]  %s4, 4096, %s59, [#allocation9], 128, 128, 8
    $region21: #{tpu_custom_call.1} parent=1 // pred_fallthru
      _
    // Predicated region
    $region22: #{tpu_custom_call.1} parent=1 // pred_check
      _
    $region23: #{tpu_custom_call.1} parent=1 // pred_check_branch
      %66 = sbr.rel (0) target = $region25
    $region24: #{tpu_custom_call.1} parent=1 // pred_region
      _
    $region25: #{tpu_custom_call.1} parent=1 // pred_fallthru
      _
    // Predicated region
    $region26: #{tpu_custom_call.1} parent=1 // pred_check
      _
    $region27: #{tpu_custom_call.1} parent=1 // pred_check_branch
      %68 = sbr.rel (0) target = $region29
    $region28: #{tpu_custom_call.1} parent=1 // pred_region
      %69 = dma.done [#allocation3], 2048
    $region29: #{tpu_custom_call.1} parent=1 // pred_fallthru
      _
    // Predicated region
    $region30: #{tpu_custom_call.1} parent=1 // pred_check
      _
    $region31: #{tpu_custom_call.1} parent=1 // pred_check_branch
      %71 = sbr.rel (0) target = $region33
    $region32: #{tpu_custom_call.1} parent=1 // pred_region
      %72 = dma.done [#allocation6], 4096
    $region33: #{tpu_custom_call.1} parent=1 // pred_fallthru
      _
    // Predicated region
    $region34: #{tpu_custom_call.1} parent=1 // pred_check
      _
    $region35: #{tpu_custom_call.1} parent=1 // pred_check_branch
      %74 = sbr.rel (0) target = $region37
    $region36: #{tpu_custom_call.1} parent=1 // pred_region
      %75 = dma.done [#allocation6], 128
    $region37: #{tpu_custom_call.1} parent=1 // pred_fallthru
      _
    // Predicated region
    $region38: #{tpu_custom_call.1} parent=1 // pred_check
      _
    $region39: #{tpu_custom_call.1} parent=1 // pred_check_branch
      %77 = sbr.rel (0) target = $region41
    $region40: #{tpu_custom_call.1} parent=1 // pred_region
      %78 = dma.done [#allocation9], 4096
    $region41: #{tpu_custom_call.1} parent=1 // pred_fallthru
      _
    %v80 = vld [vmem:[#allocation7] sm:$0xf]
    %v81 = vld [vmem:[#allocation7 + $0x4] sm:$0xf]
    %v82 = vld [vmem:[#allocation2] sm:$0xff]
    %v83 = vld [vmem:[#allocation2 + $0x8] sm:$0xff]
    %v84 = vld [vmem:[#allocation2 + $0x10] sm:$0xff]
    %v85 = vld [vmem:[#allocation2 + $0x18] sm:$0xff]
    %v86 = vld [vmem:[#allocation2 + $0x20] sm:$0xff]
    %v87 = vld [vmem:[#allocation2 + $0x28] sm:$0xff]
    %v88 = vld [vmem:[#allocation2 + $0x30] sm:$0xff]
    %v89 = vld [vmem:[#allocation2 + $0x38] sm:$0xff]
    %v90 = vld [vmem:[#allocation2 + $0x40] sm:$0xff]
    %v91 = vld [vmem:[#allocation2 + $0x48] sm:$0xff]
    %v92 = vld [vmem:[#allocation2 + $0x50] sm:$0xff]
    %v93 = vld [vmem:[#allocation2 + $0x58] sm:$0xff]
    %v94 = vld [vmem:[#allocation2 + $0x60] sm:$0xff]
    %v95 = vld [vmem:[#allocation2 + $0x68] sm:$0xff]
    %v96 = vld [vmem:[#allocation2 + $0x70] sm:$0xff]
    %v97 = vld [vmem:[#allocation2 + $0x78] sm:$0xff]
    %v100 = vunpack.c.l.b16 %v80
    %v101 = vunpack.c.l.b16 %v81
    %v102 = vpack.c.b16 %v101, %v100
    %v120 = vunpack.c.l.b16 %v82
    %v121 = vunpack.c.h.b16 %v82
    %v122 = vunpack.c.l.b16 %v83
    %v123 = vunpack.c.h.b16 %v83
    %v124 = vunpack.c.l.b16 %v84
    %v125 = vunpack.c.h.b16 %v84
    %v126 = vunpack.c.l.b16 %v85
    %v127 = vunpack.c.h.b16 %v85
    %v128 = vunpack.c.l.b16 %v86
    %v129 = vunpack.c.h.b16 %v86
    %v130 = vunpack.c.l.b16 %v87
    %v131 = vunpack.c.h.b16 %v87
    %v132 = vunpack.c.l.b16 %v88
    %v133 = vunpack.c.h.b16 %v88
    %v134 = vunpack.c.l.b16 %v89
    %v135 = vunpack.c.h.b16 %v89
    %v136 = vunpack.c.l.b16 %v90
    %v137 = vunpack.c.h.b16 %v90
    %v138 = vunpack.c.l.b16 %v91
    %v139 = vunpack.c.h.b16 %v91
    %v140 = vunpack.c.l.b16 %v92
    %v141 = vunpack.c.h.b16 %v92
    %v142 = vunpack.c.l.b16 %v93
    %v143 = vunpack.c.h.b16 %v93
    %v144 = vunpack.c.l.b16 %v94
    %v145 = vunpack.c.h.b16 %v94
    %v146 = vunpack.c.l.b16 %v95
    %v147 = vunpack.c.h.b16 %v95
    %v148 = vunpack.c.l.b16 %v96
    %v149 = vunpack.c.h.b16 %v96
    %v150 = vunpack.c.l.b16 %v97
    %v151 = vunpack.c.h.b16 %v97
    %v152 = vpack.c.b16 %v122, %v120
    %v153 = vpack.c.b16 %v123, %v121
    %v154 = vpack.c.b16 %v126, %v124
    %v155 = vpack.c.b16 %v127, %v125
    %v156 = vpack.c.b16 %v130, %v128
    %v157 = vpack.c.b16 %v131, %v129
    %v158 = vpack.c.b16 %v134, %v132
    %v159 = vpack.c.b16 %v135, %v133
    %v160 = vpack.c.b16 %v138, %v136
    %v161 = vpack.c.b16 %v139, %v137
    %v162 = vpack.c.b16 %v142, %v140
    %v163 = vpack.c.b16 %v143, %v141
    %v164 = vpack.c.b16 %v146, %v144
    %v165 = vpack.c.b16 %v147, %v145
    %v166 = vpack.c.b16 %v150, %v148
    %v167 = vpack.c.b16 %v151, %v149
    %184 = vmatprep.subr.bf16.mxu0 %v167
    %185 = vmatpush1.bf16.msra.mxu0 %v166
    %186 = vmatprep.subr.bf16.mxu0 %v165
    %187 = vmatpush1.bf16.msra.mxu0 %v164
    %188 = vmatprep.subr.bf16.mxu0 %v163
    %189 = vmatpush1.bf16.msra.mxu0 %v162
    %190 = vmatprep.subr.bf16.mxu0 %v161
    %191 = vmatpush1.bf16.msra.mxu0 %v160
    %192 = vmatprep.subr.bf16.mxu0 %v159
    %193 = vmatpush1.bf16.msra.mxu0 %v158
    %194 = vmatprep.subr.bf16.mxu0 %v157
    %195 = vmatpush1.bf16.msra.mxu0 %v156
    %196 = vmatprep.subr.bf16.mxu0 %v155
    %197 = vmatpush1.bf16.msra.mxu0 %v154
    %198 = vmatprep.subr.bf16.mxu0 %v153
    %199 = vmatpush1.bf16.msra.mxu0 %v152
    %200 = vmatprep.subr.bf16.mxu0 0
    %201 = vmatpush2.bf16.msra.mxu0 0
    %202 = vmatprep.subr.bf16.mxu0 0
    %203 = vmatpush2.bf16.msra.mxu0 0
    %204 = vmatprep.subr.bf16.mxu0 0
    %205 = vmatpush2.bf16.msra.mxu0 0
    %206 = vmatprep.subr.bf16.mxu0 0
    %207 = vmatpush2.bf16.msra.mxu0 0
    %208 = vmatprep.subr.bf16.mxu0 0
    %209 = vmatpush2.bf16.msra.mxu0 0
    %210 = vmatprep.subr.bf16.mxu0 0
    %211 = vmatpush2.bf16.msra.mxu0 0
    %212 = vmatprep.subr.bf16.mxu0 0
    %213 = vmatpush2.bf16.msra.mxu0 0
    %214 = vmatprep.subr.bf16.mxu0 0
    %215 = vmatpush2.bf16.msra.mxu0 0
    %216 = vmatprep.mubr.bf16.mxu0 0
    %217 = vmatmul.mubr.bf16.gmra.mxu0 %v102
    %v218 = vpop.f32.mrf.mxu0
    %v219 = vadd.f32 0.0, %v218
    %v220 = vpop.f32.mrf.mxu0
    %v221 = vadd.f32 0.0, %v220
    %v222 = vpop.f32.mrf.mxu0
    %v223 = vadd.f32 0.0, %v222
    %v224 = vpop.f32.mrf.mxu0
    %v225 = vadd.f32 0.0, %v224
    %226 = vdwg.mxu0
    %v227 = vpack.c.bf16 %v219, %v219
    %v228 = vpack.c.bf16 %v221, %v221
    %v229 = vld [vmem:[#allocation5] sm:$0xff]
    %v230 = vld [vmem:[#allocation5 + $0x8] sm:$0xff]
    %v231 = vld [vmem:[#allocation5 + $0x10] sm:$0xff]
    %v232 = vld [vmem:[#allocation5 + $0x18] sm:$0xff]
    %v233 = vld [vmem:[#allocation5 + $0x20] sm:$0xff]
    %v234 = vld [vmem:[#allocation5 + $0x28] sm:$0xff]
    %v235 = vld [vmem:[#allocation5 + $0x30] sm:$0xff]
    %v236 = vld [vmem:[#allocation5 + $0x38] sm:$0xff]
    %v237 = vld [vmem:[#allocation5 + $0x40] sm:$0xff]
    %v238 = vld [vmem:[#allocation5 + $0x48] sm:$0xff]
    %v239 = vld [vmem:[#allocation5 + $0x50] sm:$0xff]
    %v240 = vld [vmem:[#allocation5 + $0x58] sm:$0xff]
    %v241 = vld [vmem:[#allocation5 + $0x60] sm:$0xff]
    %v242 = vld [vmem:[#allocation5 + $0x68] sm:$0xff]
    %v243 = vld [vmem:[#allocation5 + $0x70] sm:$0xff]
    %v244 = vld [vmem:[#allocation5 + $0x78] sm:$0xff]
    %v245 = vld [vmem:[#allocation5 + $0x80] sm:$0xff]
    %v246 = vld [vmem:[#allocation5 + $0x88] sm:$0xff]
    %v247 = vld [vmem:[#allocation5 + $0x90] sm:$0xff]
    %v248 = vld [vmem:[#allocation5 + $0x98] sm:$0xff]
    %v249 = vld [vmem:[#allocation5 + $0xa0] sm:$0xff]
    %v250 = vld [vmem:[#allocation5 + $0xa8] sm:$0xff]
    %v251 = vld [vmem:[#allocation5 + $0xb0] sm:$0xff]
    %v252 = vld [vmem:[#allocation5 + $0xb8] sm:$0xff]
    %v253 = vld [vmem:[#allocation5 + $0xc0] sm:$0xff]
    %v254 = vld [vmem:[#allocation5 + $0xc8] sm:$0xff]
    %v255 = vld [vmem:[#allocation5 + $0xd0] sm:$0xff]
    %v256 = vld [vmem:[#allocation5 + $0xd8] sm:$0xff]
    %v257 = vld [vmem:[#allocation5 + $0xe0] sm:$0xff]
    %v258 = vld [vmem:[#allocation5 + $0xe8] sm:$0xff]
    %v259 = vld [vmem:[#allocation5 + $0xf0] sm:$0xff]
    %v260 = vld [vmem:[#allocation5 + $0xf8] sm:$0xff]
    %v293 = vunpack.c.l.b16 %v229
    %v294 = vunpack.c.h.b16 %v229
    %v295 = vunpack.c.l.b16 %v230
    %v296 = vunpack.c.h.b16 %v230
    %v297 = vunpack.c.l.b16 %v231
    %v298 = vunpack.c.h.b16 %v231
    %v299 = vunpack.c.l.b16 %v232
    %v300 = vunpack.c.h.b16 %v232
    %v301 = vunpack.c.l.b16 %v233
    %v302 = vunpack.c.h.b16 %v233
    %v303 = vunpack.c.l.b16 %v234
    %v304 = vunpack.c.h.b16 %v234
    %v305 = vunpack.c.l.b16 %v235
    %v306 = vunpack.c.h.b16 %v235
    %v307 = vunpack.c.l.b16 %v236
    %v308 = vunpack.c.h.b16 %v236
    %v309 = vunpack.c.l.b16 %v237
    %v310 = vunpack.c.h.b16 %v237
    %v311 = vunpack.c.l.b16 %v238
    %v312 = vunpack.c.h.b16 %v238
    %v313 = vunpack.c.l.b16 %v239
    %v314 = vunpack.c.h.b16 %v239
    %v315 = vunpack.c.l.b16 %v240
    %v316 = vunpack.c.h.b16 %v240
    %v317 = vunpack.c.l.b16 %v241
    %v318 = vunpack.c.h.b16 %v241
    %v319 = vunpack.c.l.b16 %v242
    %v320 = vunpack.c.h.b16 %v242
    %v321 = vunpack.c.l.b16 %v243
    %v322 = vunpack.c.h.b16 %v243
    %v323 = vunpack.c.l.b16 %v244
    %v324 = vunpack.c.h.b16 %v244
    %v325 = vunpack.c.l.b16 %v245
    %v326 = vunpack.c.h.b16 %v245
    %v327 = vunpack.c.l.b16 %v246
    %v328 = vunpack.c.h.b16 %v246
    %v329 = vunpack.c.l.b16 %v247
    %v330 = vunpack.c.h.b16 %v247
    %v331 = vunpack.c.l.b16 %v248
    %v332 = vunpack.c.h.b16 %v248
    %v333 = vunpack.c.l.b16 %v249
    %v334 = vunpack.c.h.b16 %v249
    %v335 = vunpack.c.l.b16 %v250
    %v336 = vunpack.c.h.b16 %v250
    %v337 = vunpack.c.l.b16 %v251
    %v338 = vunpack.c.h.b16 %v251
    %v339 = vunpack.c.l.b16 %v252
    %v340 = vunpack.c.h.b16 %v252
    %v341 = vunpack.c.l.b16 %v253
    %v342 = vunpack.c.h.b16 %v253
    %v343 = vunpack.c.l.b16 %v254
    %v344 = vunpack.c.h.b16 %v254
    %v345 = vunpack.c.l.b16 %v255
    %v346 = vunpack.c.h.b16 %v255
    %v347 = vunpack.c.l.b16 %v256
    %v348 = vunpack.c.h.b16 %v256
    %v349 = vunpack.c.l.b16 %v257
    %v350 = vunpack.c.h.b16 %v257
    %v351 = vunpack.c.l.b16 %v258
    %v352 = vunpack.c.h.b16 %v258
    %v353 = vunpack.c.l.b16 %v259
    %v354 = vunpack.c.h.b16 %v259
    %v355 = vunpack.c.l.b16 %v260
    %v356 = vunpack.c.h.b16 %v260
    %v357 = vpack.c.b16 %v295, %v293
    %v358 = vpack.c.b16 %v296, %v294
    %v359 = vpack.c.b16 %v299, %v297
    %v360 = vpack.c.b16 %v300, %v298
    %v361 = vpack.c.b16 %v303, %v301
    %v362 = vpack.c.b16 %v304, %v302
    %v363 = vpack.c.b16 %v307, %v305
    %v364 = vpack.c.b16 %v308, %v306
    %v365 = vpack.c.b16 %v311, %v309
    %v366 = vpack.c.b16 %v312, %v310
    %v367 = vpack.c.b16 %v315, %v313
    %v368 = vpack.c.b16 %v316, %v314
    %v369 = vpack.c.b16 %v319, %v317
    %v370 = vpack.c.b16 %v320, %v318
    %v371 = vpack.c.b16 %v323, %v321
    %v372 = vpack.c.b16 %v324, %v322
    %v373 = vpack.c.b16 %v327, %v325
    %v374 = vpack.c.b16 %v328, %v326
    %v375 = vpack.c.b16 %v331, %v329
    %v376 = vpack.c.b16 %v332, %v330
    %v377 = vpack.c.b16 %v335, %v333
    %v378 = vpack.c.b16 %v336, %v334
    %v379 = vpack.c.b16 %v339, %v337
    %v380 = vpack.c.b16 %v340, %v338
    %v381 = vpack.c.b16 %v343, %v341
    %v382 = vpack.c.b16 %v344, %v342
    %v383 = vpack.c.b16 %v347, %v345
    %v384 = vpack.c.b16 %v348, %v346
    %v385 = vpack.c.b16 %v351, %v349
    %v386 = vpack.c.b16 %v352, %v350
    %v387 = vpack.c.b16 %v355, %v353
    %v388 = vpack.c.b16 %v356, %v354
    %421 = vmatprep.subr.bf16.mxu0 %v372
    %422 = vmatpush1.bf16.msra.mxu0 %v371
    %423 = vmatprep.subr.bf16.mxu0 %v370
    %424 = vmatpush1.bf16.msra.mxu0 %v369
    %425 = vmatprep.subr.bf16.mxu0 %v368
    %426 = vmatpush1.bf16.msra.mxu0 %v367
    %427 = vmatprep.subr.bf16.mxu0 %v366
    %428 = vmatpush1.bf16.msra.mxu0 %v365
    %429 = vmatprep.subr.bf16.mxu0 %v364
    %430 = vmatpush1.bf16.msra.mxu0 %v363
    %431 = vmatprep.subr.bf16.mxu0 %v362
    %432 = vmatpush1.bf16.msra.mxu0 %v361
    %433 = vmatprep.subr.bf16.mxu0 %v360
    %434 = vmatpush1.bf16.msra.mxu0 %v359
    %435 = vmatprep.subr.bf16.mxu0 %v358
    %436 = vmatpush1.bf16.msra.mxu0 %v357
    %437 = vmatprep.subr.bf16.mxu0 %v388
    %438 = vmatpush2.bf16.msra.mxu0 %v387
    %439 = vmatprep.subr.bf16.mxu0 %v386
    %440 = vmatpush2.bf16.msra.mxu0 %v385
    %441 = vmatprep.subr.bf16.mxu0 %v384
    %442 = vmatpush2.bf16.msra.mxu0 %v383
    %443 = vmatprep.subr.bf16.mxu0 %v382
    %444 = vmatpush2.bf16.msra.mxu0 %v381
    %445 = vmatprep.subr.bf16.mxu0 %v380
    %446 = vmatpush2.bf16.msra.mxu0 %v379
    %447 = vmatprep.subr.bf16.mxu0 %v378
    %448 = vmatpush2.bf16.msra.mxu0 %v377
    %449 = vmatprep.subr.bf16.mxu0 %v376
    %450 = vmatpush2.bf16.msra.mxu0 %v375
    %451 = vmatprep.subr.bf16.mxu0 %v374
    %452 = vmatpush2.bf16.msra.mxu0 %v373
    %453 = vmatprep.mubr.bf16.mxu0 %v228
    %454 = vmatmul.mubr.bf16.gmra.mxu0 %v227
    %v455 = vpop.f32.mrf.mxu0
    %v456 = vadd.f32 %v223, %v455
    %v457 = vpop.f32.mrf.mxu0
    %v458 = vadd.f32 %v225, %v457
    %v459 = vpop.f32.mrf.mxu0
    %v460 = vpop.f32.mrf.mxu0
    %461 = vdwg.mxu0
    %v462 = vld [vmem:[%s3] sm:$0xff]
    %464 = vset.pattern.permute.xlu0 0
    %465 = vperm.xlu0 %464, %v462
    %v466 = vpop.permute.xlu0 %465
    %v468 = vadd.f32 %v456, %v466
    %v469 = vadd.f32 %v458, %v466
    %v470 = vmul.f32 %v468, %v468
    %v471 = vmul.f32 %v469, %v469
    %v472 = vrot.slane %v470, 4
    %v473 = vadd.f32 %v470, %v472
    %v474 = vrot.slane %v473, 2
    %v475 = vadd.f32 %v473, %v474
    %v476 = vrot.slane %v475, 1
    %v477 = vadd.f32 %v475, %v476
    %v478 = vrot.slane %v471, 4
    %v479 = vadd.f32 %v471, %v478
    %v480 = vrot.slane %v479, 2
    %v481 = vadd.f32 %v479, %v480
    %v482 = vrot.slane %v481, 1
    %v483 = vadd.f32 %v481, %v482
    %v484 = vmax.f32 %v477, 1e-24
    %v485 = vmax.f32 %v483, 1e-24
    %v486 = vrsqrt.pop %v484
    %v487 = vrsqrt.pop %v485
    %v488 = vmul.f32 %v468, %v486
    %v489 = vmul.f32 %v469, %v487
    %v490 = vsub.f32 0.0, %v488
    %v491 = vsub.f32 0.0, %v489
    %v492 = vmul.f32 %v490, 1.442695
    %v493 = vpow.pop %v492
    %v494 = vmul.f32 %v491, 1.442695
    %v495 = vpow.pop %v494
    %v496 = vadd.f32 %v493, 1.0
    %v497 = vadd.f32 %v495, 1.0
    %v498 = vrcp.pop %v496
    %v499 = vrcp.pop %v497
    %500 = vst [vmem:[#allocation10] sm:$0xff] %v498
    %501 = vst [vmem:[#allocation10 + $0x8] sm:$0xff] %v499
    %v502 = vld [vmem:[%s5] sm:$0xff]
    %v503 = vld [vmem:[%s5 + $0x8] sm:$0xff]
    loop: start=0, step=1, limit=10
    $region42: #{tpu_custom_call.1} parent=1 // loop_pre_header
      _
    $region43: #{tpu_custom_call.1} parent=1 // loop_header
      %s505 = sphi 0, %s509
      %p506 = scmp.ge.s32.totalorder %s505, 10
    $region44: #{tpu_custom_call.1} parent=1 // loop_header_branch
      %508 = sbr.rel (%p506) target = $region48
    $region45: #{tpu_custom_call.1} parent=1 // loop_body
      %v510 = vld [vmem:[#allocation10] sm:$0xff]
      %v511 = vld [vmem:[#allocation10 + $0x8] sm:$0xff]
      %v512 = vpack.c.bf16 %v510, %v510
      %v513 = vpack.c.bf16 %v511, %v511
      %v514 = vld [vmem:[#allocation8] sm:$0xff]
      %v515 = vld [vmem:[#allocation8 + $0x8] sm:$0xff]
      %v516 = vld [vmem:[#allocation8 + $0x10] sm:$0xff]
      %v517 = vld [vmem:[#allocation8 + $0x18] sm:$0xff]
      %v518 = vld [vmem:[#allocation8 + $0x20] sm:$0xff]
      %v519 = vld [vmem:[#allocation8 + $0x28] sm:$0xff]
      %v520 = vld [vmem:[#allocation8 + $0x30] sm:$0xff]
      %v521 = vld [vmem:[#allocation8 + $0x38] sm:$0xff]
      %v522 = vld [vmem:[#allocation8 + $0x40] sm:$0xff]
      %v523 = vld [vmem:[#allocation8 + $0x48] sm:$0xff]
      %v524 = vld [vmem:[#allocation8 + $0x50] sm:$0xff]
      %v525 = vld [vmem:[#allocation8 + $0x58] sm:$0xff]
      %v526 = vld [vmem:[#allocation8 + $0x60] sm:$0xff]
      %v527 = vld [vmem:[#allocation8 + $0x68] sm:$0xff]
      %v528 = vld [vmem:[#allocation8 + $0x70] sm:$0xff]
      %v529 = vld [vmem:[#allocation8 + $0x78] sm:$0xff]
      %v530 = vld [vmem:[#allocation8 + $0x80] sm:$0xff]
      %v531 = vld [vmem:[#allocation8 + $0x88] sm:$0xff]
      %v532 = vld [vmem:[#allocation8 + $0x90] sm:$0xff]
      %v533 = vld [vmem:[#allocation8 + $0x98] sm:$0xff]
      %v534 = vld [vmem:[#allocation8 + $0xa0] sm:$0xff]
      %v535 = vld [vmem:[#allocation8 + $0xa8] sm:$0xff]
      %v536 = vld [vmem:[#allocation8 + $0xb0] sm:$0xff]
      %v537 = vld [vmem:[#allocation8 + $0xb8] sm:$0xff]
      %v538 = vld [vmem:[#allocation8 + $0xc0] sm:$0xff]
      %v539 = vld [vmem:[#allocation8 + $0xc8] sm:$0xff]
      %v540 = vld [vmem:[#allocation8 + $0xd0] sm:$0xff]
      %v541 = vld [vmem:[#allocation8 + $0xd8] sm:$0xff]
      %v542 = vld [vmem:[#allocation8 + $0xe0] sm:$0xff]
      %v543 = vld [vmem:[#allocation8 + $0xe8] sm:$0xff]
      %v544 = vld [vmem:[#allocation8 + $0xf0] sm:$0xff]
      %v545 = vld [vmem:[#allocation8 + $0xf8] sm:$0xff]
      %v578 = vunpack.c.l.b16 %v514
      %v579 = vunpack.c.h.b16 %v514
      %v580 = vunpack.c.l.b16 %v515
      %v581 = vunpack.c.h.b16 %v515
      %v582 = vunpack.c.l.b16 %v516
      %v583 = vunpack.c.h.b16 %v516
      %v584 = vunpack.c.l.b16 %v517
      %v585 = vunpack.c.h.b16 %v517
      %v586 = vunpack.c.l.b16 %v518
      %v587 = vunpack.c.h.b16 %v518
      %v588 = vunpack.c.l.b16 %v519
      %v589 = vunpack.c.h.b16 %v519
      %v590 = vunpack.c.l.b16 %v520
      %v591 = vunpack.c.h.b16 %v520
      %v592 = vunpack.c.l.b16 %v521
      %v593 = vunpack.c.h.b16 %v521
      %v594 = vunpack.c.l.b16 %v522
      %v595 = vunpack.c.h.b16 %v522
      %v596 = vunpack.c.l.b16 %v523
      %v597 = vunpack.c.h.b16 %v523
      %v598 = vunpack.c.l.b16 %v524
      %v599 = vunpack.c.h.b16 %v524
      %v600 = vunpack.c.l.b16 %v525
      %v601 = vunpack.c.h.b16 %v525
      %v602 = vunpack.c.l.b16 %v526
      %v603 = vunpack.c.h.b16 %v526
      %v604 = vunpack.c.l.b16 %v527
      %v605 = vunpack.c.h.b16 %v527
      %v606 = vunpack.c.l.b16 %v528
      %v607 = vunpack.c.h.b16 %v528
      %v608 = vunpack.c.l.b16 %v529
      %v609 = vunpack.c.h.b16 %v529
      %v610 = vunpack.c.l.b16 %v530
      %v611 = vunpack.c.h.b16 %v530
      %v612 = vunpack.c.l.b16 %v531
      %v613 = vunpack.c.h.b16 %v531
      %v614 = vunpack.c.l.b16 %v532
      %v615 = vunpack.c.h.b16 %v532
      %v616 = vunpack.c.l.b16 %v533
      %v617 = vunpack.c.h.b16 %v533
      %v618 = vunpack.c.l.b16 %v534
      %v619 = vunpack.c.h.b16 %v534
      %v620 = vunpack.c.l.b16 %v535
      %v621 = vunpack.c.h.b16 %v535
      %v622 = vunpack.c.l.b16 %v536
      %v623 = vunpack.c.h.b16 %v536
      %v624 = vunpack.c.l.b16 %v537
      %v625 = vunpack.c.h.b16 %v537
      %v626 = vunpack.c.l.b16 %v538
      %v627 = vunpack.c.h.b16 %v538
      %v628 = vunpack.c.l.b16 %v539
      %v629 = vunpack.c.h.b16 %v539
      %v630 = vunpack.c.l.b16 %v540
      %v631 = vunpack.c.h.b16 %v540
      %v632 = vunpack.c.l.b16 %v541
      %v633 = vunpack.c.h.b16 %v541
      %v634 = vunpack.c.l.b16 %v542
      %v635 = vunpack.c.h.b16 %v542
      %v636 = vunpack.c.l.b16 %v543
      %v637 = vunpack.c.h.b16 %v543
      %v638 = vunpack.c.l.b16 %v544
      %v639 = vunpack.c.h.b16 %v544
      %v640 = vunpack.c.l.b16 %v545
      %v641 = vunpack.c.h.b16 %v545
      %v642 = vpack.c.b16 %v580, %v578
      %v643 = vpack.c.b16 %v581, %v579
      %v644 = vpack.c.b16 %v584, %v582
      %v645 = vpack.c.b16 %v585, %v583
      %v646 = vpack.c.b16 %v588, %v586
      %v647 = vpack.c.b16 %v589, %v587
      %v648 = vpack.c.b16 %v592, %v590
      %v649 = vpack.c.b16 %v593, %v591
      %v650 = vpack.c.b16 %v596, %v594
      %v651 = vpack.c.b16 %v597, %v595
      %v652 = vpack.c.b16 %v600, %v598
      %v653 = vpack.c.b16 %v601, %v599
      %v654 = vpack.c.b16 %v604, %v602
      %v655 = vpack.c.b16 %v605, %v603
      %v656 = vpack.c.b16 %v608, %v606
      %v657 = vpack.c.b16 %v609, %v607
      %v658 = vpack.c.b16 %v612, %v610
      %v659 = vpack.c.b16 %v613, %v611
      %v660 = vpack.c.b16 %v616, %v614
      %v661 = vpack.c.b16 %v617, %v615
      %v662 = vpack.c.b16 %v620, %v618
      %v663 = vpack.c.b16 %v621, %v619
      %v664 = vpack.c.b16 %v624, %v622
      %v665 = vpack.c.b16 %v625, %v623
      %v666 = vpack.c.b16 %v628, %v626
      %v667 = vpack.c.b16 %v629, %v627
      %v668 = vpack.c.b16 %v632, %v630
      %v669 = vpack.c.b16 %v633, %v631
      %v670 = vpack.c.b16 %v636, %v634
      %v671 = vpack.c.b16 %v637, %v635
      %v672 = vpack.c.b16 %v640, %v638
      %v673 = vpack.c.b16 %v641, %v639
      %706 = vmatprep.subr.bf16.mxu0 %v657
      %707 = vmatpush1.bf16.msra.mxu0 %v656
      %708 = vmatprep.subr.bf16.mxu0 %v655
      %709 = vmatpush1.bf16.msra.mxu0 %v654
      %710 = vmatprep.subr.bf16.mxu0 %v653
      %711 = vmatpush1.bf16.msra.mxu0 %v652
      %712 = vmatprep.subr.bf16.mxu0 %v651
      %713 = vmatpush1.bf16.msra.mxu0 %v650
      %714 = vmatprep.subr.bf16.mxu0 %v649
      %715 = vmatpush1.bf16.msra.mxu0 %v648
      %716 = vmatprep.subr.bf16.mxu0 %v647
      %717 = vmatpush1.bf16.msra.mxu0 %v646
      %718 = vmatprep.subr.bf16.mxu0 %v645
      %719 = vmatpush1.bf16.msra.mxu0 %v644
      %720 = vmatprep.subr.bf16.mxu0 %v643
      %721 = vmatpush1.bf16.msra.mxu0 %v642
      %722 = vmatprep.subr.bf16.mxu0 %v673
      %723 = vmatpush2.bf16.msra.mxu0 %v672
      %724 = vmatprep.subr.bf16.mxu0 %v671
      %725 = vmatpush2.bf16.msra.mxu0 %v670
      %726 = vmatprep.subr.bf16.mxu0 %v669
      %727 = vmatpush2.bf16.msra.mxu0 %v668
      %728 = vmatprep.subr.bf16.mxu0 %v667
      %729 = vmatpush2.bf16.msra.mxu0 %v666
      %730 = vmatprep.subr.bf16.mxu0 %v665
      %731 = vmatpush2.bf16.msra.mxu0 %v664
      %732 = vmatprep.subr.bf16.mxu0 %v663
      %733 = vmatpush2.bf16.msra.mxu0 %v662
      %734 = vmatprep.subr.bf16.mxu0 %v661
      %735 = vmatpush2.bf16.msra.mxu0 %v660
      %736 = vmatprep.subr.bf16.mxu0 %v659
      %737 = vmatpush2.bf16.msra.mxu0 %v658
      %738 = vmatprep.mubr.bf16.mxu0 %v513
      %739 = vmatmul.mubr.bf16.gmra.mxu0 %v512
      %v740 = vpop.f32.mrf.mxu0
      %v741 = vadd.f32 %v502, %v740
      %v742 = vpop.f32.mrf.mxu0
      %v743 = vadd.f32 %v503, %v742
      %v744 = vpop.f32.mrf.mxu0
      %v745 = vpop.f32.mrf.mxu0
      %746 = vdwg.mxu0
      %v747 = vpack.c.bf16 %v741, %v741
      %v748 = vpack.c.bf16 %v743, %v743
      %749 = vmatprep.subr.bf16.mxu0 %v657
      %750 = vmatpush1.bf16.msra.mxu0 %v656
      %751 = vmatprep.subr.bf16.mxu0 %v655
      %752 = vmatpush1.bf16.msra.mxu0 %v654
      %753 = vmatprep.subr.bf16.mxu0 %v653
      %754 = vmatpush1.bf16.msra.mxu0 %v652
      %755 = vmatprep.subr.bf16.mxu0 %v651
      %756 = vmatpush1.bf16.msra.mxu0 %v650
      %757 = vmatprep.subr.bf16.mxu0 %v649
      %758 = vmatpush1.bf16.msra.mxu0 %v648
      %759 = vmatprep.subr.bf16.mxu0 %v647
      %760 = vmatpush1.bf16.msra.mxu0 %v646
      %761 = vmatprep.subr.bf16.mxu0 %v645
      %762 = vmatpush1.bf16.msra.mxu0 %v644
      %763 = vmatprep.subr.bf16.mxu0 %v643
      %764 = vmatpush1.bf16.msra.mxu0 %v642
      %765 = vmatprep.subr.bf16.mxu0 %v673
      %766 = vmatpush2.bf16.msra.mxu0 %v672
      %767 = vmatprep.subr.bf16.mxu0 %v671
      %768 = vmatpush2.bf16.msra.mxu0 %v670
      %769 = vmatprep.subr.bf16.mxu0 %v669
      %770 = vmatpush2.bf16.msra.mxu0 %v668
      %771 = vmatprep.subr.bf16.mxu0 %v667
      %772 = vmatpush2.bf16.msra.mxu0 %v666
      %773 = vmatprep.subr.bf16.mxu0 %v665
      %774 = vmatpush2.bf16.msra.mxu0 %v664
      %775 = vmatprep.subr.bf16.mxu0 %v663
      %776 = vmatpush2.bf16.msra.mxu0 %v662
      %777 = vmatprep.subr.bf16.mxu0 %v661
      %778 = vmatpush2.bf16.msra.mxu0 %v660
      %779 = vmatprep.subr.bf16.mxu0 %v659
      %780 = vmatpush2.bf16.msra.mxu0 %v658
      %781 = vmatprep.mubr.bf16.mxu0 %v748
      %782 = vmatmul.mubr.bf16.gmra.mxu0 %v747
      %v783 = vpop.f32.mrf.mxu0
      %v784 = vadd.f32 %v502, %v783
      %v785 = vpop.f32.mrf.mxu0
      %v786 = vadd.f32 %v503, %v785
      %v787 = vpop.f32.mrf.mxu0
      %v788 = vpop.f32.mrf.mxu0
      %789 = vdwg.mxu0
      %v790 = vpack.c.bf16 %v784, %v784
      %v791 = vpack.c.bf16 %v786, %v786
      %792 = vmatprep.subr.bf16.mxu0 %v657
      %793 = vmatpush1.bf16.msra.mxu0 %v656
      %794 = vmatprep.subr.bf16.mxu0 %v655
      %795 = vmatpush1.bf16.msra.mxu0 %v654
      %796 = vmatprep.subr.bf16.mxu0 %v653
      %797 = vmatpush1.bf16.msra.mxu0 %v652
      %798 = vmatprep.subr.bf16.mxu0 %v651
      %799 = vmatpush1.bf16.msra.mxu0 %v650
      %800 = vmatprep.subr.bf16.mxu0 %v649
      %801 = vmatpush1.bf16.msra.mxu0 %v648
      %802 = vmatprep.subr.bf16.mxu0 %v647
      %803 = vmatpush1.bf16.msra.mxu0 %v646
      %804 = vmatprep.subr.bf16.mxu0 %v645
      %805 = vmatpush1.bf16.msra.mxu0 %v644
      %806 = vmatprep.subr.bf16.mxu0 %v643
      %807 = vmatpush1.bf16.msra.mxu0 %v642
      %808 = vmatprep.subr.bf16.mxu0 %v673
      %809 = vmatpush2.bf16.msra.mxu0 %v672
      %810 = vmatprep.subr.bf16.mxu0 %v671
      %811 = vmatpush2.bf16.msra.mxu0 %v670
      %812 = vmatprep.subr.bf16.mxu0 %v669
      %813 = vmatpush2.bf16.msra.mxu0 %v668
      %814 = vmatprep.subr.bf16.mxu0 %v667
      %815 = vmatpush2.bf16.msra.mxu0 %v666
      %816 = vmatprep.subr.bf16.mxu0 %v665
      %817 = vmatpush2.bf16.msra.mxu0 %v664
      %818 = vmatprep.subr.bf16.mxu0 %v663
      %819 = vmatpush2.bf16.msra.mxu0 %v662
      %820 = vmatprep.subr.bf16.mxu0 %v661
      %821 = vmatpush2.bf16.msra.mxu0 %v660
      %822 = vmatprep.subr.bf16.mxu0 %v659
      %823 = vmatpush2.bf16.msra.mxu0 %v658
      %824 = vmatprep.mubr.bf16.mxu0 %v791
      %825 = vmatmul.mubr.bf16.gmra.mxu0 %v790
      %v826 = vpop.f32.mrf.mxu0
      %v827 = vadd.f32 %v502, %v826
      %v828 = vpop.f32.mrf.mxu0
      %v829 = vadd.f32 %v503, %v828
      %v830 = vpop.f32.mrf.mxu0
      %v831 = vpop.f32.mrf.mxu0
      %832 = vdwg.mxu0
      %v833 = vpack.c.bf16 %v827, %v827
      %v834 = vpack.c.bf16 %v829, %v829
      %835 = vmatprep.subr.bf16.mxu0 %v657
      %836 = vmatpush1.bf16.msra.mxu0 %v656
      %837 = vmatprep.subr.bf16.mxu0 %v655
      %838 = vmatpush1.bf16.msra.mxu0 %v654
      %839 = vmatprep.subr.bf16.mxu0 %v653
      %840 = vmatpush1.bf16.msra.mxu0 %v652
      %841 = vmatprep.subr.bf16.mxu0 %v651
      %842 = vmatpush1.bf16.msra.mxu0 %v650
      %843 = vmatprep.subr.bf16.mxu0 %v649
      %844 = vmatpush1.bf16.msra.mxu0 %v648
      %845 = vmatprep.subr.bf16.mxu0 %v647
      %846 = vmatpush1.bf16.msra.mxu0 %v646
      %847 = vmatprep.subr.bf16.mxu0 %v645
      %848 = vmatpush1.bf16.msra.mxu0 %v644
      %849 = vmatprep.subr.bf16.mxu0 %v643
      %850 = vmatpush1.bf16.msra.mxu0 %v642
      %851 = vmatprep.subr.bf16.mxu0 %v673
      %852 = vmatpush2.bf16.msra.mxu0 %v672
      %853 = vmatprep.subr.bf16.mxu0 %v671
      %854 = vmatpush2.bf16.msra.mxu0 %v670
      %855 = vmatprep.subr.bf16.mxu0 %v669
      %856 = vmatpush2.bf16.msra.mxu0 %v668
      %857 = vmatprep.subr.bf16.mxu0 %v667
      %858 = vmatpush2.bf16.msra.mxu0 %v666
      %859 = vmatprep.subr.bf16.mxu0 %v665
      %860 = vmatpush2.bf16.msra.mxu0 %v664
      %861 = vmatprep.subr.bf16.mxu0 %v663
      %862 = vmatpush2.bf16.msra.mxu0 %v662
      %863 = vmatprep.subr.bf16.mxu0 %v661
      %864 = vmatpush2.bf16.msra.mxu0 %v660
      %865 = vmatprep.subr.bf16.mxu0 %v659
      %866 = vmatpush2.bf16.msra.mxu0 %v658
      %867 = vmatprep.mubr.bf16.mxu0 %v834
      %868 = vmatmul.mubr.bf16.gmra.mxu0 %v833
      %v869 = vpop.f32.mrf.mxu0
      %v870 = vadd.f32 %v502, %v869
      %v871 = vpop.f32.mrf.mxu0
      %v872 = vadd.f32 %v503, %v871
      %v873 = vpop.f32.mrf.mxu0
      %v874 = vpop.f32.mrf.mxu0
      %875 = vdwg.mxu0
      %v876 = vpack.c.bf16 %v870, %v870
      %v877 = vpack.c.bf16 %v872, %v872
      %878 = vmatprep.subr.bf16.mxu0 %v657
      %879 = vmatpush1.bf16.msra.mxu0 %v656
      %880 = vmatprep.subr.bf16.mxu0 %v655
      %881 = vmatpush1.bf16.msra.mxu0 %v654
      %882 = vmatprep.subr.bf16.mxu0 %v653
      %883 = vmatpush1.bf16.msra.mxu0 %v652
      %884 = vmatprep.subr.bf16.mxu0 %v651
      %885 = vmatpush1.bf16.msra.mxu0 %v650
      %886 = vmatprep.subr.bf16.mxu0 %v649
      %887 = vmatpush1.bf16.msra.mxu0 %v648
      %888 = vmatprep.subr.bf16.mxu0 %v647
      %889 = vmatpush1.bf16.msra.mxu0 %v646
      %890 = vmatprep.subr.bf16.mxu0 %v645
      %891 = vmatpush1.bf16.msra.mxu0 %v644
      %892 = vmatprep.subr.bf16.mxu0 %v643
      %893 = vmatpush1.bf16.msra.mxu0 %v642
      %894 = vmatprep.subr.bf16.mxu0 %v673
      %895 = vmatpush2.bf16.msra.mxu0 %v672
      %896 = vmatprep.subr.bf16.mxu0 %v671
      %897 = vmatpush2.bf16.msra.mxu0 %v670
      %898 = vmatprep.subr.bf16.mxu0 %v669
      %899 = vmatpush2.bf16.msra.mxu0 %v668
      %900 = vmatprep.subr.bf16.mxu0 %v667
      %901 = vmatpush2.bf16.msra.mxu0 %v666
      %902 = vmatprep.subr.bf16.mxu0 %v665
      %903 = vmatpush2.bf16.msra.mxu0 %v664
      %904 = vmatprep.subr.bf16.mxu0 %v663
      %905 = vmatpush2.bf16.msra.mxu0 %v662
      %906 = vmatprep.subr.bf16.mxu0 %v661
      %907 = vmatpush2.bf16.msra.mxu0 %v660
      %908 = vmatprep.subr.bf16.mxu0 %v659
      %909 = vmatpush2.bf16.msra.mxu0 %v658
      %910 = vmatprep.mubr.bf16.mxu0 %v877
      %911 = vmatmul.mubr.bf16.gmra.mxu0 %v876
      %v912 = vpop.f32.mrf.mxu0
      %v913 = vadd.f32 %v502, %v912
      %v914 = vpop.f32.mrf.mxu0
      %v915 = vadd.f32 %v503, %v914
      %v916 = vpop.f32.mrf.mxu0
      %v917 = vpop.f32.mrf.mxu0
      %918 = vdwg.mxu0
      %919 = vst [vmem:[#allocation10] sm:$0xff] %v913
      %920 = vst [vmem:[#allocation10 + $0x8] sm:$0xff] %v915
    $region46: #{tpu_custom_call.1} parent=1 // loop_footer
      %s509 = sadd.s32 1, %s505
    $region47: #{tpu_custom_call.1} parent=1 // loop_footer_branch
      %504 = sbr.rel target = $region43
    $region48: #{tpu_custom_call.1} parent=1 // loop_exit
      _
    // Predicated region
    $region49: #{tpu_custom_call.1} parent=1 // pred_check
      _
    $region50: #{tpu_custom_call.1} parent=1 // pred_check_branch
      %922 = sbr.rel (0) target = $region52
    $region51: #{tpu_custom_call.1} parent=1 // pred_region
      %s924 = ssub.s32 256, 256
      %925 = vsyncadd [#allocation4], %s924
      %s927 = sshll.u32 [#allocation10], 4
      %s928 = int_to_ptr.vmem [resolvable:$true] %s927
      %930 = dma.vmem_to_hbm [thread:$0]  %s928, 256, %s6, [#allocation4]
    $region52: #{tpu_custom_call.1} parent=1 // pred_fallthru
      _
    // Predicated region
    $region53: #{tpu_custom_call.1} parent=1 // pred_check
      _
    $region54: #{tpu_custom_call.1} parent=1 // pred_check_branch
      %932 = sbr.rel (0) target = $region56
    $region55: #{tpu_custom_call.1} parent=1 // pred_region
      %933 = dma.done [#allocation4], 256
    $region56: #{tpu_custom_call.1} parent=1 // pred_fallthru
      _
    %934 = vsyncpa [#allocation3], 1
    %935 = vsyncpa [#allocation6], 1
    %936 = vsyncpa [#allocation9], 1
    %937 = vsyncpa [#allocation4], 1

</llo_original>
